<compile_context>
chip_gen: v7x
topology: tpu7x:2x2x1
jax: 0.10.0
libtpu: 0.0.40
codegen_flags: <defaults>
</compile_context>

<pallas_src>
import jax
import jax.numpy as jnp
from jax.experimental import pallas as pl
from jax.experimental.pallas import tpu as pltpu


def _scaled_sinusoidal_kernel(s_tab_ref, c_tab_ref, bsin_ref, bcos_ref, out_ref):
    half = s_tab_ref.shape[-1]

    S = s_tab_ref[...]            # (tile_s, half)  scale*sin(r*f)   (tile-invariant)
    C = c_tab_ref[...]            # (tile_s, half)  scale*cos(r*f)
    sb = bsin_ref[0]              # (1, half)       sin(base*f) for this tile
    cb = bcos_ref[0]              # (1, half)       cos(base*f)

    # Angle addition: scale*sin((base+r)*f), scale*cos((base+r)*f).
    sin_out = S * cb + C * sb
    cos_out = C * cb - S * sb

    if half % 128 == 0:
        # Two lane-dense half-width stores — no concat intermediate.
        out_ref[:, :half] = sin_out.astype(out_ref.dtype)
        out_ref[:, half:] = cos_out.astype(out_ref.dtype)
    else:
        # Tiny-dim fallback (half not lane-aligned): single full-width store.
        out_ref[...] = jnp.concatenate([sin_out, cos_out], axis=-1).astype(out_ref.dtype)


def scaled_sinusoidal_embedding(
    x,
    scale,
    inv_freq,
    pos=None,
    seq_start_pos=None,
    *,
    tile_s: int | None = None,
    out_dtype=jnp.float32,
):
    """Pallas forward of ScaledSinusoidalEmbedding. Only x.shape[1] (seq) is used."""
    if pos is not None:
        # TODO(synk): a user-supplied position tensor is not lowered to the kernel.
        raise NotImplementedError("explicit `pos` tensor is not supported")

    seq = int(x.shape[1])
    if seq >= (1 << 24):
        raise ValueError("f32 positions lose integer precision beyond 2^24")

    half_dim = int(inv_freq.shape[0])
    dim = 2 * half_dim
    out_bytes = jnp.dtype(out_dtype).itemsize

    # pos = arange(seq) - seq_start_pos  (scalar offset only).
    start = jnp.float32(0.0)
    if seq_start_pos is not None:
        sp = jnp.asarray(seq_start_pos, jnp.float32).reshape(-1)
        if sp.shape[0] != 1:
            # TODO(synk): per-batch seq_start_pos ((batch, seq, dim) output) is not lowered.
            raise NotImplementedError("only scalar seq_start_pos is supported")
        start = sp[0]

    # Adaptive row tile: ~2 MiB per output buffer, clamped to [8, 1024].
    if tile_s is None:
        tile_s = (2 << 20) // max(dim * out_bytes, 1)
        tile_s = int(max(8, min(1024, (tile_s // 8) * 8)))
    if seq <= tile_s:
        tile_s = seq
    num_tiles = pl.cdiv(seq, tile_s)
    seq_padded = num_tiles * tile_s          # pad + slice handles non-divisible seq

    inv = inv_freq.astype(jnp.float32)
    scale_f = jnp.asarray(scale, jnp.float32).reshape(-1)[0]

    # Tile-invariant tables: scale*sin(r*f), scale*cos(r*f), r in [0, tile_s).
    r_ang = jnp.arange(tile_s, dtype=jnp.float32)[:, None] * inv[None, :]   # (tile_s, half)
    s_tab = jnp.sin(r_ang) * scale_f
    c_tab = jnp.cos(r_ang) * scale_f

    # Per-tile base-angle rows: sin/cos((i*tile_s - start) * f).
    base = jnp.arange(num_tiles, dtype=jnp.float32) * jnp.float32(tile_s) - start
    b_ang = base[:, None] * inv[None, :]                                    # (num_tiles, half)
    b_sin = jnp.sin(b_ang)[:, None, :]                                      # (num_tiles, 1, half)
    b_cos = jnp.cos(b_ang)[:, None, :]

    # VMEM budget: double-buffered output tile + the (const-indexed) tables.
    out_tile_bytes = tile_s * dim * out_bytes
    tab_bytes = tile_s * half_dim * 4
    need = 2 * out_tile_bytes + 4 * tab_bytes + 4 * half_dim * 4 + (1 << 20)
    vmem_limit = int(min(64 << 20, max(8 << 20, 2 * need)))

    cost = pl.CostEstimate(
        flops=int(3 * seq_padded * dim),        # 4 mul + 2 add per half-pair
        transcendentals=0,                      # all trig precomputed outside
        bytes_accessed=int(seq_padded * dim * out_bytes
                           + 2 * tab_bytes + 2 * num_tiles * half_dim * 4),
    )

    out = pl.pallas_call(
        _scaled_sinusoidal_kernel,
        out_shape=jax.ShapeDtypeStruct((seq_padded, dim), out_dtype),
        grid=(num_tiles,),
        in_specs=[
            pl.BlockSpec((tile_s, half_dim), lambda i: (0, 0)),      # s_tab (resident)
            pl.BlockSpec((tile_s, half_dim), lambda i: (0, 0)),      # c_tab (resident)
            pl.BlockSpec((1, 1, half_dim), lambda i: (i, 0, 0)),     # sin(base*f) per tile
            pl.BlockSpec((1, 1, half_dim), lambda i: (i, 0, 0)),     # cos(base*f) per tile
        ],
        out_specs=pl.BlockSpec((tile_s, dim), lambda i: (i, 0)),
        compiler_params=pltpu.CompilerParams(
            dimension_semantics=("parallel",),
            vmem_limit_bytes=vmem_limit,
        ),
        cost_estimate=cost,
    )(s_tab, c_tab, b_sin, b_cos)

    return out if seq_padded == seq else out[:seq]


def init_params(dim: int, theta: int = 10000):
    """Deterministic parameter init matching the module's __init__."""
    assert dim % 2 == 0
    scale = jnp.ones((1,), jnp.float32) * (dim ** -0.5)           # nn.Parameter
    half_dim = dim // 2
    freq_seq = jnp.arange(half_dim, dtype=jnp.float32) / half_dim
    inv_freq = jnp.asarray(theta, jnp.float32) ** (-freq_seq)     # buffer
    return scale, inv_freq


def _reference(seq, scale, inv_freq, start=0.0):
    pos = jnp.arange(seq, dtype=jnp.float32) - start
    emb = pos[:, None] * inv_freq[None, :]
    emb = jnp.concatenate([jnp.sin(emb), jnp.cos(emb)], axis=-1)
    return emb * jnp.asarray(scale, jnp.float32).reshape(-1)[0]


if __name__ == "__main__":
    key = jax.random.PRNGKey(0)

    # --- small test (module-sized toy shapes) ---------------------------------
    dim = 32
    batch, seq = 2, 8
    scale, inv_freq = init_params(dim)
    x = jax.random.normal(key, (batch, seq, dim), jnp.float32)  # only shape[1] is used

    out = jax.block_until_ready(scaled_sinusoidal_embedding(x, scale, inv_freq))
    ref = _reference(seq, scale, inv_freq)
    assert out.shape == (seq, dim)
    assert jnp.allclose(out, ref, atol=1e-5, rtol=1e-5)

    # scalar seq_start_pos path
    out_s = jax.block_until_ready(
        scaled_sinusoidal_embedding(x, scale, inv_freq, seq_start_pos=jnp.asarray(2.0)))
    ref_s = _reference(seq, scale, inv_freq, start=2.0)
    assert jnp.allclose(out_s, ref_s, atol=1e-5, rtol=1e-5)

    # --- tiled test: exercises the multi-tile grid + half-width stores --------
    dim2, seq2 = 256, 1024
    scale2, inv_freq2 = init_params(dim2)
    x2 = jax.random.normal(key, (1, seq2, dim2), jnp.float32)
    out2 = jax.block_until_ready(
        scaled_sinusoidal_embedding(x2, scale2, inv_freq2, tile_s=256))
    ref2 = _reference(seq2, scale2, inv_freq2)
    assert out2.shape == (seq2, dim2)
    assert jnp.allclose(out2, ref2, atol=1e-4, rtol=1e-4)

    # --- non-divisible seq (pad + slice path) ----------------------------------
    seq3 = 1000
    x3 = jnp.zeros((1, seq3, dim2), jnp.float32)
    out3 = jax.block_until_ready(
        scaled_sinusoidal_embedding(x3, scale2, inv_freq2, tile_s=256))
    ref3 = _reference(seq3, scale2, inv_freq2)
    assert out3.shape == (seq3, dim2)
    assert jnp.allclose(out3, ref3, atol=1e-4, rtol=1e-4)

    print("KERNEL_OK")
</pallas_src>

<mosaic_0001>
module attributes {stable_mosaic.version = 11 : i64} {
  func.func @_scaled_sinusoidal_kernel(%arg0: i32, %arg1: memref<8x16xf32, #tpu.memory_space<vmem>>, %arg2: memref<8x16xf32, #tpu.memory_space<vmem>>, %arg3: memref<1x1x16xf32, #tpu.memory_space<vmem>>, %arg4: memref<1x1x16xf32, #tpu.memory_space<vmem>>, %arg5: memref<8x32xf32, #tpu.memory_space<vmem>>) attributes {dimension_semantics = [#tpu.dimension_semantics<parallel>], iteration_bounds = array<i64: 1>, scalar_prefetch = 0 : i64, scratch_operands = 0 : i64, tpu.core_type = #tpu.core_type<tc>, window_params = [{pipeline_mode = #tpu.pipeline_mode<synchronous>, transform_indices = @transform_0, window_bounds = array<i64: 8, 16>}, {pipeline_mode = #tpu.pipeline_mode<synchronous>, transform_indices = @transform_1, window_bounds = array<i64: 8, 16>}, {transform_indices = @transform_2, window_bounds = array<i64: 1, 1, 16>}, {transform_indices = @transform_3, window_bounds = array<i64: 1, 1, 16>}, {transform_indices = @transform_4, window_bounds = array<i64: 8, 32>}]} {
    %c0 = arith.constant 0 : index
    %c0_0 = arith.constant 0 : index
    %0 = vector.load %arg1[%c0, %c0_0] : memref<8x16xf32, #tpu.memory_space<vmem>>, vector<8x16xf32>
    %c0_1 = arith.constant 0 : index
    %c0_2 = arith.constant 0 : index
    %1 = vector.load %arg2[%c0_1, %c0_2] : memref<8x16xf32, #tpu.memory_space<vmem>>, vector<8x16xf32>
    %c0_3 = arith.constant 0 : index
    %c0_4 = arith.constant 0 : index
    %c0_5 = arith.constant 0 : index
    %2 = vector.load %arg3[%c0_3, %c0_4, %c0_5] : memref<1x1x16xf32, #tpu.memory_space<vmem>>, vector<1x1x16xf32>
    %3 = vector.shape_cast %2 : vector<1x1x16xf32> to vector<1x16xf32>
    %c0_6 = arith.constant 0 : index
    %c0_7 = arith.constant 0 : index
    %c0_8 = arith.constant 0 : index
    %4 = vector.load %arg4[%c0_6, %c0_7, %c0_8] : memref<1x1x16xf32, #tpu.memory_space<vmem>>, vector<1x1x16xf32>
    %5 = vector.shape_cast %4 : vector<1x1x16xf32> to vector<1x16xf32>
    %6 = vector.broadcast %5 : vector<1x16xf32> to vector<8x16xf32>
    %7 = arith.mulf %0, %6 : vector<8x16xf32>
    %8 = vector.broadcast %3 : vector<1x16xf32> to vector<8x16xf32>
    %9 = arith.mulf %1, %8 : vector<8x16xf32>
    %10 = arith.addf %7, %9 : vector<8x16xf32>
    %11 = vector.broadcast %5 : vector<1x16xf32> to vector<8x16xf32>
    %12 = arith.mulf %1, %11 : vector<8x16xf32>
    %13 = vector.broadcast %3 : vector<1x16xf32> to vector<8x16xf32>
    %14 = arith.mulf %0, %13 : vector<8x16xf32>
    %15 = arith.subf %12, %14 : vector<8x16xf32>
    %16 = tpu.concatenate %10, %15 in 1 : vector<8x16xf32>, vector<8x16xf32> -> vector<8x32xf32>
    %c0_9 = arith.constant 0 : index
    %c0_10 = arith.constant 0 : index
    %17 = vector.load %arg5[%c0_9, %c0_10] : memref<8x32xf32, #tpu.memory_space<vmem>>, vector<8x32xf32>
    tpu.vector_store %arg5[%c0_9, %c0_10], %16 {strides = array<i32>} : memref<8x32xf32, #tpu.memory_space<vmem>>, vector<8x32xf32>,
    return
  }
  func.func @transform_0(%arg0: i32) -> (i32, i32) {
    %c0_i32 = arith.constant 0 : i32
    %c0_i32_0 = arith.constant 0 : i32
    %c0_i32_1 = arith.constant 0 : i32
    return %c0_i32, %c0_i32_0 : i32, i32
  }
  func.func @transform_1(%arg0: i32) -> (i32, i32) {
    %c0_i32 = arith.constant 0 : i32
    %c0_i32_0 = arith.constant 0 : i32
    %c0_i32_1 = arith.constant 0 : i32
    return %c0_i32, %c0_i32_0 : i32, i32
  }
  func.func @transform_2(%arg0: i32) -> (i32, i32, i32) {
    %c0_i32 = arith.constant 0 : i32
    %c0_i32_0 = arith.constant 0 : i32
    %c0_i32_1 = arith.constant 0 : i32
    return %arg0, %c0_i32, %c0_i32_0 : i32, i32, i32
  }
  func.func @transform_3(%arg0: i32) -> (i32, i32, i32) {
    %c0_i32 = arith.constant 0 : i32
    %c0_i32_0 = arith.constant 0 : i32
    %c0_i32_1 = arith.constant 0 : i32
    return %arg0, %c0_i32, %c0_i32_0 : i32, i32, i32
  }
  func.func @transform_4(%arg0: i32) -> (i32, i32) {
    %c0_i32 = arith.constant 0 : i32
    %c0_i32_0 = arith.constant 0 : i32
    return %arg0, %c0_i32 : i32, i32
  }
}

</mosaic_0001>

<llo_original>
// kernel: tpu_custom_call.1
$region0: #{tpu_custom_call.1}
  #allocation0 [shape = 'u32[]', space=smem, size = 0x4, offset = 0x4, fixed_abs, tag = 'smem constant byte address 0x4 - core index']
  #allocation1 [shape = 'u32[144,128]{1,0:T(1,128)}', space=vmem, size = 0x12000, scoped, tag = 'internal scratch']
  %s0 = inlined_call_operand.hbm [shape: f32[8,16], index: 0, kind: input, shape index: {}]
  %s1 = inlined_call_operand.hbm [shape: f32[8,16], index: 1, kind: input, shape index: {}]
  %s2 = inlined_call_operand.vmem [shape: f32[1,1,16], index: 2, kind: input, shape index: {}]
  %s3 = inlined_call_operand.vmem [shape: f32[1,1,16], index: 3, kind: input, shape index: {}]
  %s4 = inlined_call_operand.hbm [shape: f32[8,32], index: 4, kind: output, shape index: {}]
  %s5 = sld [smem:[#allocation0]]
  $region34: #{tpu_custom_call.1} parent=0
    _
  %s7 = ssub.s32 1, %s5
  %s8 = scalar_select 0, %s7, %s5
  $region1: #{tpu_custom_call.1} parent=0
    #allocation2 [shape = 'u8[4096]{0}', space=vmem, size = 0x1000, scoped, tag = 'input window, operand 0, single buffered']
    #allocation3 [shape = 's32[1]{0}', space=sflag, size = 0x4, scoped, tag = 'scoped memory for tpu_custom_call.1']
    #allocation4 [shape = 's32[1]{0}', space=sflag, size = 0x4, scoped, tag = 'scoped memory for tpu_custom_call.1']
    #allocation5 [shape = 'u8[4096]{0}', space=vmem, size = 0x1000, scoped, tag = 'input window, operand 1, single buffered']
    #allocation6 [shape = 's32[1]{0}', space=sflag, size = 0x4, scoped, tag = 'scoped memory for tpu_custom_call.1']
    #allocation7 [shape = 'u8[4096]{0}', space=vmem, size = 0x1000, scoped, tag = 'output window, operand 0, single buffered']
    %9 = vsyncpa [#allocation3], 0
    %10 = vsyncpa [#allocation6], 0
    %11 = vsyncpa [#allocation4], 0
    // Predicated region
    $region2: #{tpu_custom_call.1} parent=1 // pred_check
      _
    $region3: #{tpu_custom_call.1} parent=1 // pred_check_branch
      %13 = sbr.rel (0) target = $region5
    $region4: #{tpu_custom_call.1} parent=1 // pred_region
      %s15 = ssub.s32 128, 128
      %16 = vsyncadd [#allocation3], %s15
      %s18 = sshll.u32 [#allocation2], 4
      %s19 = int_to_ptr.vmem [resolvable:$true] %s18
      %21 = dma.hbm_to_vmem [thread:$0]  %s0, 128, %s19, [#allocation3]
    $region5: #{tpu_custom_call.1} parent=1 // pred_fallthru
      _
    // Predicated region
    $region6: #{tpu_custom_call.1} parent=1 // pred_check
      _
    $region7: #{tpu_custom_call.1} parent=1 // pred_check_branch
      %23 = sbr.rel (0) target = $region9
    $region8: #{tpu_custom_call.1} parent=1 // pred_region
      %s25 = ssub.s32 128, 128
      %26 = vsyncadd [#allocation6], %s25
      %s28 = sshll.u32 [#allocation5], 4
      %s29 = int_to_ptr.vmem [resolvable:$true] %s28
      %31 = dma.hbm_to_vmem [thread:$0]  %s1, 128, %s29, [#allocation6]
    $region9: #{tpu_custom_call.1} parent=1 // pred_fallthru
      _
    // Predicated region
    $region10: #{tpu_custom_call.1} parent=1 // pred_check
      _
    $region11: #{tpu_custom_call.1} parent=1 // pred_check_branch
      %33 = sbr.rel (0) target = $region13
    $region12: #{tpu_custom_call.1} parent=1 // pred_region
      _
    $region13: #{tpu_custom_call.1} parent=1 // pred_fallthru
      _
    // Predicated region
    $region14: #{tpu_custom_call.1} parent=1 // pred_check
      _
    $region15: #{tpu_custom_call.1} parent=1 // pred_check_branch
      %35 = sbr.rel (0) target = $region17
    $region16: #{tpu_custom_call.1} parent=1 // pred_region
      _
    $region17: #{tpu_custom_call.1} parent=1 // pred_fallthru
      _
    // Predicated region
    $region18: #{tpu_custom_call.1} parent=1 // pred_check
      _
    $region19: #{tpu_custom_call.1} parent=1 // pred_check_branch
      %37 = sbr.rel (0) target = $region21
    $region20: #{tpu_custom_call.1} parent=1 // pred_region
      %38 = dma.done [#allocation3], 128
    $region21: #{tpu_custom_call.1} parent=1 // pred_fallthru
      _
    // Predicated region
    $region22: #{tpu_custom_call.1} parent=1 // pred_check
      _
    $region23: #{tpu_custom_call.1} parent=1 // pred_check_branch
      %40 = sbr.rel (0) target = $region25
    $region24: #{tpu_custom_call.1} parent=1 // pred_region
      %41 = dma.done [#allocation6], 128
    $region25: #{tpu_custom_call.1} parent=1 // pred_fallthru
      _
    %v42 = vld [vmem:[#allocation2] sm:$0xff]
    %v43 = vld [vmem:[#allocation5] sm:$0xff]
    %v44 = vld [vmem:[%s2] sm:$0x1]
    %v45 = vld [vmem:[%s3] sm:$0x1]
    %v47 = vlaneseq
    %v48 = vshrl.u32 %v47, 7
    %v49 = vsub.s32 0, %v48
    %v50 = vrot.slane %v45, %v49
    %v52 = vmul.f32 %v42, %v50
    %v54 = vlaneseq
    %v55 = vshrl.u32 %v54, 7
    %v56 = vsub.s32 0, %v55
    %v57 = vrot.slane %v44, %v56
    %v59 = vmul.f32 %v43, %v57
    %v60 = vadd.f32 %v52, %v59
    %v61 = vmul.f32 %v43, %v50
    %v62 = vmul.f32 %v42, %v57
    %v63 = vsub.f32 %v61, %v62
    %65 = vrot.lane.b32.xlu0 %v63, 16
    %v66 = vpop.permute.xlu0 %65
    %vm68 = vcmask 130048
    %v69 = vsel %vm68, %v60, %v66
    %vm70 = vcmask 261120
    %71 = vst.msk [vmem:[#allocation7] sm:$0xff] %vm70, %v69
    // Predicated region
    $region26: #{tpu_custom_call.1} parent=1 // pred_check
      _
    $region27: #{tpu_custom_call.1} parent=1 // pred_check_branch
      %73 = sbr.rel (0) target = $region29
    $region28: #{tpu_custom_call.1} parent=1 // pred_region
      %s75 = ssub.s32 128, 128
      %76 = vsyncadd [#allocation4], %s75
      %s78 = sshll.u32 [#allocation7], 4
      %s79 = int_to_ptr.vmem [resolvable:$true] %s78
      %81 = dma.vmem_to_hbm [thread:$0]  %s79, 128, %s4, [#allocation4]
    $region29: #{tpu_custom_call.1} parent=1 // pred_fallthru
      _
    // Predicated region
    $region30: #{tpu_custom_call.1} parent=1 // pred_check
      _
    $region31: #{tpu_custom_call.1} parent=1 // pred_check_branch
      %83 = sbr.rel (0) target = $region33
    $region32: #{tpu_custom_call.1} parent=1 // pred_region
      %84 = dma.done [#allocation4], 128
    $region33: #{tpu_custom_call.1} parent=1 // pred_fallthru
      _
    %85 = vsyncpa [#allocation3], 1
    %86 = vsyncpa [#allocation6], 1
    %87 = vsyncpa [#allocation4], 1

</llo_original>
